<compile_context>
chip_gen: v7x
topology: tpu7x:2x2x1
jax: 0.10.0
libtpu: 0.0.40
codegen_flags: <defaults>
</compile_context>

<pallas_src>
import jax
import jax.numpy as jnp
from jax.experimental import pallas as pl
from jax.experimental.pallas import tpu as pltpu

_TARGET_CHUNK_BYTES = 16 * 1024 * 1024   # ~16 MiB per DMA chunk
_MAX_INFLIGHT = 8                        # max concurrent DMAs / semaphores


def _compute_chunks(lead, bytes_per_lead_slice):
    """Split the leading axis into <=_MAX_INFLIGHT near-equal chunks."""
    total_bytes = max(1, lead * bytes_per_lead_slice)
    want = -(-total_bytes // _TARGET_CHUNK_BYTES)          # ceil div
    n = max(1, min(lead, _MAX_INFLIGHT, want))
    base, rem = divmod(lead, n)
    chunks, start = [], 0
    for i in range(n):
        size = base + (1 if i < rem else 0)
        chunks.append((start, size))
        start += size
    return tuple(chunks)


def _make_dma_copy_kernel(chunks, ndim, lead):
    """Kernel factory: chunked HBM->HBM async-copy of the whole array."""
    trailing = tuple(slice(None) for _ in range(ndim - 1))

    def kernel(x_hbm, o_hbm, sems):
        copies = []
        for idx, (start, size) in enumerate(chunks):
            if len(chunks) == 1 and start == 0 and size == lead:
                cp = pltpu.make_async_copy(x_hbm, o_hbm, sems.at[idx])
            else:
                sl = (pl.ds(start, size),) + trailing
                cp = pltpu.make_async_copy(
                    x_hbm.at[sl], o_hbm.at[sl], sems.at[idx]
                )
            cp.start()
            copies.append(cp)
        for cp in copies:
            cp.wait()

    return kernel


def neo_conv_forward(x, *, use_pallas_copy=True):
    """Pallas implementation of Neo_Conv.forward (identity).

    use_pallas_copy=False is the production path: returns x directly with
    zero HBM traffic (strictly optimal for an identity forward).  The
    Pallas path round-trips the data through a chunked HBM->HBM DMA so the
    kernel demonstrably runs on-device.
    """
    if not use_pallas_copy or x.ndim == 0 or x.size == 0:
        return x

    lead = x.shape[0]
    bytes_per_lead_slice = (x.size // lead) * x.dtype.itemsize
    chunks = _compute_chunks(lead, bytes_per_lead_slice)
    kernel = _make_dma_copy_kernel(chunks, x.ndim, lead)

    return pl.pallas_call(
        kernel,
        out_shape=jax.ShapeDtypeStruct(x.shape, x.dtype),
        in_specs=[pl.BlockSpec(memory_space=pl.ANY)],
        out_specs=pl.BlockSpec(memory_space=pl.ANY),
        scratch_shapes=[pltpu.SemaphoreType.DMA((len(chunks),))],
    )(x)


def init_neo_conv_params(key):
    """Deterministic parameter init mirroring Neo_Conv.__init__.

    These parameters exist on the module but are NOT used by forward();
    they are constructed only for module fidelity.
    """
    k1, k2, k3, k4 = jax.random.split(key, 4)
    params = {
        # conv1_1: Conv2d(3, 64, kernel_size=3, padding=1)
        "conv1_1_w": jax.random.normal(k1, (64, 3, 3, 3), jnp.float32) * 0.05,
        "conv1_1_b": jax.random.normal(k2, (64,), jnp.float32) * 0.05,
        # conv1_2: Conv2d(64, 64, kernel_size=3, padding=1)
        "conv1_2_w": jax.random.normal(k3, (64, 64, 3, 3), jnp.float32) * 0.05,
        "conv1_2_b": jax.random.normal(k4, (64,), jnp.float32) * 0.05,
        # conv1_s: MaxPool2d(kernel_size=2, stride=2) has no parameters.
    }
    return params


if __name__ == "__main__":
    key = jax.random.PRNGKey(0)
    k_params, k_x = jax.random.split(key)

    # Parameters (unused by forward, kept for module fidelity).
    _params = init_neo_conv_params(k_params)

    # Small NCHW input consistent with conv1_1's expected 3 input channels.
    x = jax.random.normal(k_x, (2, 3, 16, 16), jnp.float32)

    # Exercise the Pallas HBM->HBM DMA path explicitly.
    y = neo_conv_forward(x, use_pallas_copy=True)
    y = jax.block_until_ready(y)

    # Verify identity semantics exactly.
    assert y.shape == x.shape and y.dtype == x.dtype
    assert bool(jnp.array_equal(y, x))

    # Production short-circuit path (zero HBM traffic) is also identity.
    z = neo_conv_forward(x, use_pallas_copy=False)
    assert z is x

    print("KERNEL_OK")
</pallas_src>

<mosaic_0001>
module attributes {stable_mosaic.version = 11 : i64} {
  func.func @kernel(%arg0: memref<2x3x16x16xf32, #tpu.memory_space<any>>, %arg1: memref<2x3x16x16xf32, #tpu.memory_space<any>>, %arg2: memref<1x!tpu.dma_semaphore, #tpu.memory_space<semaphore_mem>>) attributes {dimension_semantics = [], scalar_prefetch = 0 : i64, scratch_operands = 1 : i64, tpu.core_type = #tpu.core_type<tc>} {
    %c0_i32 = arith.constant 0 : i32
    %0 = tpu.memref_slice %arg2[%c0_i32] : memref<1x!tpu.dma_semaphore, #tpu.memory_space<semaphore_mem>> -> memref<1x!tpu.dma_semaphore, #tpu.memory_space<semaphore_mem>>
    %1 = tpu.memref_squeeze %0 : memref<1x!tpu.dma_semaphore, #tpu.memory_space<semaphore_mem>> -> memref<!tpu.dma_semaphore, #tpu.memory_space<semaphore_mem>>
    tpu.enqueue_dma source(%arg0 : memref<2x3x16x16xf32, #tpu.memory_space<any>>) target(%arg1 : memref<2x3x16x16xf32, #tpu.memory_space<any>>) target_semaphore(%1 : memref<!tpu.dma_semaphore, #tpu.memory_space<semaphore_mem>>)
    %c0_i32_0 = arith.constant 0 : i32
    %2 = tpu.memref_slice %arg2[%c0_i32_0] : memref<1x!tpu.dma_semaphore, #tpu.memory_space<semaphore_mem>> -> memref<1x!tpu.dma_semaphore, #tpu.memory_space<semaphore_mem>>
    %3 = tpu.memref_squeeze %2 : memref<1x!tpu.dma_semaphore, #tpu.memory_space<semaphore_mem>> -> memref<!tpu.dma_semaphore, #tpu.memory_space<semaphore_mem>>
    tpu.wait_dma2 semaphore(%3 : memref<!tpu.dma_semaphore, #tpu.memory_space<semaphore_mem>>) src(%arg0 : memref<2x3x16x16xf32, #tpu.memory_space<any>>) dst(%arg1 : memref<2x3x16x16xf32, #tpu.memory_space<any>>)
    return
  }
}

</mosaic_0001>

<llo_original>
// kernel: tpu_custom_call.1
$region0: #{tpu_custom_call.1}
  #allocation0 [shape = 'u32[]', space=smem, size = 0x4, offset = 0x4, fixed_abs, tag = 'smem constant byte address 0x4 - core index']
  #allocation1 [shape = 'u32[144,128]{1,0:T(1,128)}', space=vmem, size = 0x12000, scoped, tag = 'internal scratch']
  #allocation2 [shape = 's32[1]{0}', space=sflag, size = 0x4, scoped, tag = 'scratch operand']
  #allocation3 [shape = 's32[]', space=sflag, size = 0x4, offset = 0, fixed_abs, tag = 'sflag constant byte address 0x0 - dummy sync flag']
  #allocation4 [shape = 'u32[0]{0}', space=smem, size = 0, offset = 0, fixed_abs, tag = 'smem constant byte address 0x0 - null']
  %s0 = inlined_call_operand.hbm [shape: f32[2,3,16,16], index: 0, kind: input, shape index: {}]
  %s1 = inlined_call_operand.hbm [shape: f32[2,3,16,16], index: 1, kind: output, shape index: {}]
  %s2 = sld [smem:[#allocation0]]
  $region2: #{tpu_custom_call.1} parent=0
    _
  %s4 = ssub.s32 1, %s2
  %s5 = scalar_select 0, %s4, %s2
  %s7 = sshll.u32 1, 14
  %s8 = sxor.u32 4294967295, %s7
  %s11 = sshll.u32 3, 24
  %s12 = sxor.u32 4294967295, %s11
  %s13 = sand.u32 0, %s12
  %s15 = sor.u32 %s13, 0
  %18 = dma.general %s0, 1536, %s1, [#allocation2], [#allocation3], [#allocation4], %s15, 0
  %s19 = smul.u32 2, 3
  %s20 = smul.u32 %s19, 16
  %s21 = smul.u32 %s20, 1
  %s22 = sshll.u32 %s21, 4
  %23 = dma.done [#allocation2], %s22
  %24 = vsyncmov [#allocation2]
  %s25 = vpop.sfrf %24
  %p26 = scmp.eq.s32.totalorder %s25, 0
  %p27 = pneg %p26
  %29 = shalt.err (%p27)

</llo_original>
